<compile_context>
chip_gen: v6e
topology: v6e:2x2x1
jax: 0.10.0
libtpu: 0.0.40
codegen_flags: <defaults>
</compile_context>

<pallas_src>
import jax
import jax.numpy as jnp
from jax.experimental import pallas as pl
from jax.experimental.pallas import tpu as pltpu


# --------------------------------------------------------------------------- #
# Kernel
# --------------------------------------------------------------------------- #
def _encoder_kernel(x_ref, w1_ref, b1_ref, wh_ref, bh_ref, out_ref):
    # shared_layers: Linear(x_dim, hidden) + ReLU, f32 MXU accumulation.
    h = jnp.dot(x_ref[...], w1_ref[...],
                preferred_element_type=jnp.float32) + b1_ref[...]
    h = jnp.maximum(h, 0.0).astype(wh_ref.dtype)

    # Fused mu / log_std heads: ONE lane-dense matmul -> [tile_b, n_pad].
    # Lanes [0, z_dim) are mean, [z_dim, 2*z_dim) are log_std, rest is padding.
    heads = jnp.dot(h, wh_ref[...],
                    preferred_element_type=jnp.float32) + bh_ref[...]
    out_ref[...] = heads.astype(out_ref.dtype)


# --------------------------------------------------------------------------- #
# Setup-time parameter preparation (runs once, NOT per forward call)
# --------------------------------------------------------------------------- #
def prepare_encoder_params(w1, b1, wmu, bmu, wsig, bsig, *,
                           compute_dtype=jnp.bfloat16):
    """Fuse the two heads into one 128-lane-padded weight/bias, reshape b1 and
    cast everything to the compute dtype ONCE at init time."""
    x_dim, hidden_dim = w1.shape
    z_dim = wmu.shape[1]
    n_heads = 2 * z_dim
    n_pad = pl.cdiv(n_heads, 128) * 128          # lane-dense output slab width

    wh = jnp.zeros((hidden_dim, n_pad), compute_dtype)
    wh = wh.at[:, :z_dim].set(wmu.astype(compute_dtype))
    wh = wh.at[:, z_dim:n_heads].set(wsig.astype(compute_dtype))
    bh = jnp.zeros((1, n_pad), compute_dtype)
    bh = bh.at[:, :z_dim].set(bmu.reshape(1, -1).astype(compute_dtype))
    bh = bh.at[:, z_dim:n_heads].set(bsig.reshape(1, -1).astype(compute_dtype))

    params = dict(
        w1=w1.astype(compute_dtype),
        b1=b1.reshape(1, -1).astype(compute_dtype),
        wh=wh,
        bh=bh,
    )
    meta = dict(x_dim=x_dim, hidden_dim=hidden_dim, z_dim=z_dim,
                n_heads=n_heads, n_pad=n_pad, compute_dtype=compute_dtype)
    return params, meta


# --------------------------------------------------------------------------- #
# Forward
# --------------------------------------------------------------------------- #
def encoder_forward(x, params, meta, *, tile_b=None, min_grid_steps=1,
                    out_dtype=None, max_tile_b=1024):
    """Returns (mean, log_std), each [B, z_dim]."""
    B, x_dim = x.shape
    assert x_dim == meta["x_dim"]
    cdt = meta["compute_dtype"]
    out_dtype = cdt if out_dtype is None else out_dtype

    # x should already arrive in the compute dtype from the producer; this is
    # only a correctness fallback (avoid relying on it on the hot path).
    if x.dtype != cdt:
        x = x.astype(cdt)

    # Batch tiling:
    #   min_grid_steps=1  -> whole batch, single grid step   (v5e / v6e: 1 TC)
    #   min_grid_steps=2  -> >=2 "parallel" steps             (v7x: 2 TCs)
    #   large B           -> tiles capped at max_tile_b (amortize step overhead)
    if tile_b is None:
        tile_b = pl.cdiv(pl.cdiv(B, max(1, min_grid_steps)), 8) * 8
        tile_b = max(8, min(max_tile_b, tile_b))
    B_pad = pl.cdiv(B, tile_b) * tile_b
    if B_pad != B:
        x = jnp.pad(x, ((0, B_pad - B), (0, 0)))

    hidden_dim = meta["hidden_dim"]
    n_pad = meta["n_pad"]
    n_heads = meta["n_heads"]
    z_dim = meta["z_dim"]

    grid_spec = pltpu.PrefetchScalarGridSpec(
        num_scalar_prefetch=0,
        grid=(B_pad // tile_b,),
        in_specs=[
            pl.BlockSpec((tile_b, x_dim), lambda i: (i, 0)),       # x tile
            pl.BlockSpec((x_dim, hidden_dim), lambda i: (0, 0)),   # W1 (resident)
            pl.BlockSpec((1, hidden_dim), lambda i: (0, 0)),       # b1
            pl.BlockSpec((hidden_dim, n_pad), lambda i: (0, 0)),   # fused W_heads
            pl.BlockSpec((1, n_pad), lambda i: (0, 0)),            # fused b_heads
        ],
        out_specs=pl.BlockSpec((tile_b, n_pad), lambda i: (i, 0)), # fused output
    )

    out = pl.pallas_call(
        _encoder_kernel,
        out_shape=jax.ShapeDtypeStruct((B_pad, n_pad), out_dtype),
        grid_spec=grid_spec,
        compiler_params=pltpu.CompilerParams(
            dimension_semantics=("parallel",)),
    )(x, params["w1"], params["b1"], params["wh"], params["bh"])

    # Single slice of the fused slab; the mean/log_std split is a view-level
    # split that fuses into the consumer under jit.
    heads = out[:B, :n_heads]
    return heads[:, :z_dim], heads[:, z_dim:]


def make_encoder(w1, b1, wmu, bmu, wsig, bsig, *, compute_dtype=jnp.bfloat16,
                 out_dtype=None, tile_b=None, min_grid_steps=1):
    """Build a jitted forward with all parameter prep done once at setup."""
    params, meta = prepare_encoder_params(
        w1, b1, wmu, bmu, wsig, bsig, compute_dtype=compute_dtype)

    @jax.jit
    def forward(x):
        return encoder_forward(x, params, meta, tile_b=tile_b,
                               min_grid_steps=min_grid_steps,
                               out_dtype=out_dtype)
    return forward


# --------------------------------------------------------------------------- #
# Demo / self-test
# --------------------------------------------------------------------------- #
def _init_linear(key, in_dim, out_dim, dtype=jnp.float32):
    # Mimics torch.nn.Linear default init: U[-1/sqrt(in), 1/sqrt(in)].
    kw, kb = jax.random.split(key)
    bound = 1.0 / jnp.sqrt(jnp.asarray(in_dim, dtype))
    w = jax.random.uniform(kw, (in_dim, out_dim), dtype, -bound, bound)
    b = jax.random.uniform(kb, (out_dim,), dtype, -bound, bound)
    return w, b


if __name__ == "__main__":
    # Small shapes consistent with Encoder(x_dim, hidden_dim, z_dim).
    batch, x_dim, hidden_dim, z_dim = 256, 256, 128, 32

    key = jax.random.PRNGKey(0)
    kx, k1, k2, k3 = jax.random.split(key, 4)

    x = jax.random.normal(kx, (batch, x_dim), jnp.float32)
    w1, b1 = _init_linear(k1, x_dim, hidden_dim)
    wmu, bmu = _init_linear(k2, hidden_dim, z_dim)
    wsig, bsig = _init_linear(k3, hidden_dim, z_dim)

    # Pure-JAX reference.
    h_ref = jnp.maximum(x @ w1 + b1.reshape(1, -1), 0.0)
    mean_ref = h_ref @ wmu + bmu.reshape(1, -1)
    log_std_ref = h_ref @ wsig + bsig.reshape(1, -1)

    # ---- f32 path, single grid step (v5e/v6e-style config) -----------------
    enc_f32 = make_encoder(w1, b1, wmu, bmu, wsig, bsig,
                           compute_dtype=jnp.float32, min_grid_steps=1)
    mean, log_std = enc_f32(x)
    jax.block_until_ready((mean, log_std))
    assert mean.shape == (batch, z_dim) and log_std.shape == (batch, z_dim)
    assert jnp.allclose(mean, mean_ref, atol=1e-5, rtol=1e-5)
    assert jnp.allclose(log_std, log_std_ref, atol=1e-5, rtol=1e-5)

    # ---- bf16 in/compute/out path, 2 "parallel" grid steps (v7x config) ----
    # NOTE: h is re-quantized to bf16 between the two layers (intentional);
    # MXU accumulation stays f32 via preferred_element_type.
    enc_bf16 = make_encoder(w1, b1, wmu, bmu, wsig, bsig,
                            compute_dtype=jnp.bfloat16, min_grid_steps=2)
    x_bf16 = x.astype(jnp.bfloat16)          # producer delivers bf16 directly
    mean_bf, log_std_bf = enc_bf16(x_bf16)
    jax.block_until_ready((mean_bf, log_std_bf))
    assert mean_bf.shape == (batch, z_dim) and log_std_bf.shape == (batch, z_dim)
    assert mean_bf.dtype == jnp.bfloat16 and log_std_bf.dtype == jnp.bfloat16
    assert jnp.allclose(mean_bf.astype(jnp.float32), mean_ref,
                        atol=1e-1, rtol=1e-1)
    assert jnp.allclose(log_std_bf.astype(jnp.float32), log_std_ref,
                        atol=1e-1, rtol=1e-1)

    print("KERNEL_OK")
</pallas_src>

<mosaic_0001>
module attributes {stable_mosaic.version = 11 : i64} {
  func.func @_encoder_kernel(%arg0: i32, %arg1: memref<256x256xf32, #tpu.memory_space<vmem>>, %arg2: memref<256x128xf32, #tpu.memory_space<vmem>>, %arg3: memref<1x128xf32, #tpu.memory_space<vmem>>, %arg4: memref<128x128xf32, #tpu.memory_space<vmem>>, %arg5: memref<1x128xf32, #tpu.memory_space<vmem>>, %arg6: memref<256x128xf32, #tpu.memory_space<vmem>>) attributes {dimension_semantics = [#tpu.dimension_semantics<parallel>], iteration_bounds = array<i64: 1>, scalar_prefetch = 0 : i64, scratch_operands = 0 : i64, tpu.core_type = #tpu.core_type<tc>, window_params = [{transform_indices = @transform_0, window_bounds = array<i64: 256, 256>}, {pipeline_mode = #tpu.pipeline_mode<synchronous>, transform_indices = @transform_1, window_bounds = array<i64: 256, 128>}, {pipeline_mode = #tpu.pipeline_mode<synchronous>, transform_indices = @transform_2, window_bounds = array<i64: 1, 128>}, {pipeline_mode = #tpu.pipeline_mode<synchronous>, transform_indices = @transform_3, window_bounds = array<i64: 128, 128>}, {pipeline_mode = #tpu.pipeline_mode<synchronous>, transform_indices = @transform_4, window_bounds = array<i64: 1, 128>}, {transform_indices = @transform_5, window_bounds = array<i64: 256, 128>}]} {
    %c0 = arith.constant 0 : index
    %c0_0 = arith.constant 0 : index
    %0 = vector.load %arg1[%c0, %c0_0] : memref<256x256xf32, #tpu.memory_space<vmem>>, vector<256x256xf32>
    %c0_1 = arith.constant 0 : index
    %c0_2 = arith.constant 0 : index
    %1 = vector.load %arg2[%c0_1, %c0_2] : memref<256x128xf32, #tpu.memory_space<vmem>>, vector<256x128xf32>
    %cst = arith.constant dense<0.000000e+00> : vector<256x128xf32>
    %2 = tpu.matmul %0, %1, %cst {dimension_numbers = #tpu.dot_dimension_numbers<[1], [0], [0], [1], [0, 0, 1, 1], [], []>} : vector<256x256xf32>, vector<256x128xf32>, vector<256x128xf32> -> vector<256x128xf32>
    %c0_3 = arith.constant 0 : index
    %c0_4 = arith.constant 0 : index
    %3 = vector.load %arg3[%c0_3, %c0_4] : memref<1x128xf32, #tpu.memory_space<vmem>>, vector<1x128xf32>
    %4 = vector.broadcast %3 : vector<1x128xf32> to vector<256x128xf32>
    %5 = arith.addf %2, %4 : vector<256x128xf32>
    %cst_5 = arith.constant 0.000000e+00 : f32
    %6 = vector.broadcast %cst_5 : f32 to vector<256x128xf32>
    %7 = arith.maximumf %5, %6 : vector<256x128xf32>
    %c0_6 = arith.constant 0 : index
    %c0_7 = arith.constant 0 : index
    %8 = vector.load %arg4[%c0_6, %c0_7] : memref<128x128xf32, #tpu.memory_space<vmem>>, vector<128x128xf32>
    %cst_8 = arith.constant dense<0.000000e+00> : vector<256x128xf32>
    %9 = tpu.matmul %7, %8, %cst_8 {dimension_numbers = #tpu.dot_dimension_numbers<[1], [0], [0], [1], [0, 0, 1, 1], [], []>} : vector<256x128xf32>, vector<128x128xf32>, vector<256x128xf32> -> vector<256x128xf32>
    %c0_9 = arith.constant 0 : index
    %c0_10 = arith.constant 0 : index
    %10 = vector.load %arg5[%c0_9, %c0_10] : memref<1x128xf32, #tpu.memory_space<vmem>>, vector<1x128xf32>
    %11 = vector.broadcast %10 : vector<1x128xf32> to vector<256x128xf32>
    %12 = arith.addf %9, %11 : vector<256x128xf32>
    %c0_11 = arith.constant 0 : index
    %c0_12 = arith.constant 0 : index
    %13 = vector.load %arg6[%c0_11, %c0_12] : memref<256x128xf32, #tpu.memory_space<vmem>>, vector<256x128xf32>
    tpu.vector_store %arg6[%c0_11, %c0_12], %12 {strides = array<i32>} : memref<256x128xf32, #tpu.memory_space<vmem>>, vector<256x128xf32>,
    return
  }
  func.func @transform_0(%arg0: i32) -> (i32, i32) {
    %c0_i32 = arith.constant 0 : i32
    %c0_i32_0 = arith.constant 0 : i32
    return %arg0, %c0_i32 : i32, i32
  }
  func.func @transform_1(%arg0: i32) -> (i32, i32) {
    %c0_i32 = arith.constant 0 : i32
    %c0_i32_0 = arith.constant 0 : i32
    %c0_i32_1 = arith.constant 0 : i32
    return %c0_i32, %c0_i32_0 : i32, i32
  }
  func.func @transform_2(%arg0: i32) -> (i32, i32) {
    %c0_i32 = arith.constant 0 : i32
    %c0_i32_0 = arith.constant 0 : i32
    %c0_i32_1 = arith.constant 0 : i32
    return %c0_i32, %c0_i32_0 : i32, i32
  }
  func.func @transform_3(%arg0: i32) -> (i32, i32) {
    %c0_i32 = arith.constant 0 : i32
    %c0_i32_0 = arith.constant 0 : i32
    %c0_i32_1 = arith.constant 0 : i32
    return %c0_i32, %c0_i32_0 : i32, i32
  }
  func.func @transform_4(%arg0: i32) -> (i32, i32) {
    %c0_i32 = arith.constant 0 : i32
    %c0_i32_0 = arith.constant 0 : i32
    %c0_i32_1 = arith.constant 0 : i32
    return %c0_i32, %c0_i32_0 : i32, i32
  }
  func.func @transform_5(%arg0: i32) -> (i32, i32) {
    %c0_i32 = arith.constant 0 : i32
    %c0_i32_0 = arith.constant 0 : i32
    return %arg0, %c0_i32 : i32, i32
  }
}

</mosaic_0001>

<llo_original>
// kernel: forward.1
$region0: #{forward.1}
  #allocation0 [shape = 'u32[]', space=smem, size = 0x4, offset = 0x4, fixed_abs, tag = 'smem constant byte address 0x4 - core index']
  #allocation1 [shape = 'u32[144,128]{1,0:T(1,128)}', space=vmem, size = 0x12000, scoped, tag = 'internal scratch']
  %s0 = inlined_call_operand.hbm [shape: f32[256,256], index: 0, kind: input, shape index: {}]
  %s1 = inlined_call_operand.hbm [shape: f32[256,128], index: 1, kind: input, shape index: {}]
  %s2 = inlined_call_operand.vmem [shape: f32[1,128], index: 2, kind: input, shape index: {}]
  %s3 = inlined_call_operand.hbm [shape: f32[128,128], index: 3, kind: input, shape index: {}]
  %s4 = inlined_call_operand.vmem [shape: f32[1,128], index: 4, kind: input, shape index: {}]
  %s5 = inlined_call_operand.vmem [shape: f32[256,128], index: 5, kind: output, shape index: {}]
  %s6 = sld [smem:[#allocation0]]
  $region42: #{forward.1} parent=0
    _
  %s8 = ssub.s32 1, %s6
  %s9 = scalar_select 0, %s8, %s6
  $region1: #{forward.1} parent=0
    #allocation2 [shape = 'u8[262144]{0}', space=vmem, size = 0x40000, scoped, tag = 'input window, operand 0, single buffered']
    #allocation3 [shape = 's32[1]{0}', space=sflag, size = 0x4, scoped, tag = 'scoped memory for forward.1']
    #allocation4 [shape = 'u8[131072]{0}', space=vmem, size = 0x20000, scoped, tag = 'input window, operand 1, single buffered']
    #allocation5 [shape = 's32[1]{0}', space=sflag, size = 0x4, scoped, tag = 'scoped memory for forward.1']
    #allocation6 [shape = 'u8[65536]{0}', space=vmem, size = 0x10000, scoped, tag = 'input window, operand 3, single buffered']
    %10 = vsyncpa [#allocation3], 0
    %11 = vsyncpa [#allocation5], 0
    // Predicated region
    $region2: #{forward.1} parent=1 // pred_check
      _
    $region3: #{forward.1} parent=1 // pred_check_branch
      %13 = sbr.rel (0) target = $region5
    $region4: #{forward.1} parent=1 // pred_region
      %s15 = ssub.s32 8192, 8192
      %16 = vsyncadd [#allocation3], %s15
      %s17 = sshll.u32 [#allocation2], 4
      %s18 = int_to_ptr.vmem [resolvable:$true] %s17
      %23 = dma.hbm_to_vmem [thread:$0]  %s0, 8192, %s18, [#allocation3], 256, 256, 16
    $region5: #{forward.1} parent=1 // pred_fallthru
      _
    // Predicated region
    $region6: #{forward.1} parent=1 // pred_check
      _
    $region7: #{forward.1} parent=1 // pred_check_branch
      %25 = sbr.rel (0) target = $region9
    $region8: #{forward.1} parent=1 // pred_region
      %s27 = ssub.s32 4096, 4096
      %28 = vsyncadd [#allocation5], %s27
      %s29 = sshll.u32 [#allocation4], 4
      %s30 = int_to_ptr.vmem [resolvable:$true] %s29
      %35 = dma.hbm_to_vmem [thread:$0]  %s1, 4096, %s30, [#allocation5], 128, 128, 8
    $region9: #{forward.1} parent=1 // pred_fallthru
      _
    // Predicated region
    $region10: #{forward.1} parent=1 // pred_check
      _
    $region11: #{forward.1} parent=1 // pred_check_branch
      %37 = sbr.rel (0) target = $region13
    $region12: #{forward.1} parent=1 // pred_region
      _
    $region13: #{forward.1} parent=1 // pred_fallthru
      _
    // Predicated region
    $region14: #{forward.1} parent=1 // pred_check
      _
    $region15: #{forward.1} parent=1 // pred_check_branch
      %39 = sbr.rel (0) target = $region17
    $region16: #{forward.1} parent=1 // pred_region
      %s41 = ssub.s32 2048, 2048
      %42 = vsyncadd [#allocation5], %s41
      %s43 = sshll.u32 [#allocation6], 4
      %s44 = int_to_ptr.vmem [resolvable:$true] %s43
      %49 = dma.hbm_to_vmem [thread:$0]  %s3, 2048, %s44, [#allocation5], 128, 128, 8
    $region17: #{forward.1} parent=1 // pred_fallthru
      _
    // Predicated region
    $region18: #{forward.1} parent=1 // pred_check
      _
    $region19: #{forward.1} parent=1 // pred_check_branch
      %51 = sbr.rel (0) target = $region21
    $region20: #{forward.1} parent=1 // pred_region
      _
    $region21: #{forward.1} parent=1 // pred_fallthru
      _
    // Predicated region
    $region22: #{forward.1} parent=1 // pred_check
      _
    $region23: #{forward.1} parent=1 // pred_check_branch
      %53 = sbr.rel (0) target = $region25
    $region24: #{forward.1} parent=1 // pred_region
      %54 = dma.done [#allocation3], 8192
    $region25: #{forward.1} parent=1 // pred_fallthru
      _
    // Predicated region
    $region26: #{forward.1} parent=1 // pred_check
      _
    $region27: #{forward.1} parent=1 // pred_check_branch
      %56 = sbr.rel (0) target = $region29
    $region28: #{forward.1} parent=1 // pred_region
      %57 = dma.done [#allocation5], 4096
    $region29: #{forward.1} parent=1 // pred_fallthru
      _
    // Predicated region
    $region30: #{forward.1} parent=1 // pred_check
      _
    $region31: #{forward.1} parent=1 // pred_check_branch
      %59 = sbr.rel (0) target = $region33
    $region32: #{forward.1} parent=1 // pred_region
      %60 = dma.done [#allocation5], 2048
    $region33: #{forward.1} parent=1 // pred_fallthru
      _
    %v61 = vld [vmem:[#allocation2] sm:$0xff]
    %v62 = vld [vmem:[#allocation2 + $0x8] sm:$0xff]
    %v63 = vld [vmem:[#allocation2 + $0x10] sm:$0xff]
    %v64 = vld [vmem:[#allocation2 + $0x18] sm:$0xff]
    %v65 = vld [vmem:[#allocation2 + $0x20] sm:$0xff]
    %v66 = vld [vmem:[#allocation2 + $0x28] sm:$0xff]
    %v67 = vld [vmem:[#allocation2 + $0x30] sm:$0xff]
    %v68 = vld [vmem:[#allocation2 + $0x38] sm:$0xff]
    %v69 = vld [vmem:[#allocation2 + $0x40] sm:$0xff]
    %v70 = vld [vmem:[#allocation2 + $0x48] sm:$0xff]
    %v71 = vld [vmem:[#allocation2 + $0x50] sm:$0xff]
    %v72 = vld [vmem:[#allocation2 + $0x58] sm:$0xff]
    %v73 = vld [vmem:[#allocation2 + $0x60] sm:$0xff]
    %v74 = vld [vmem:[#allocation2 + $0x68] sm:$0xff]
    %v75 = vld [vmem:[#allocation2 + $0x70] sm:$0xff]
    %v76 = vld [vmem:[#allocation2 + $0x78] sm:$0xff]
    %v77 = vld [vmem:[#allocation2 + $0x80] sm:$0xff]
    %v78 = vld [vmem:[#allocation2 + $0x88] sm:$0xff]
    %v79 = vld [vmem:[#allocation2 + $0x90] sm:$0xff]
    %v80 = vld [vmem:[#allocation2 + $0x98] sm:$0xff]
    %v81 = vld [vmem:[#allocation2 + $0xa0] sm:$0xff]
    %v82 = vld [vmem:[#allocation2 + $0xa8] sm:$0xff]
    %v83 = vld [vmem:[#allocation2 + $0xb0] sm:$0xff]
    %v84 = vld [vmem:[#allocation2 + $0xb8] sm:$0xff]
    %v85 = vld [vmem:[#allocation2 + $0xc0] sm:$0xff]
    %v86 = vld [vmem:[#allocation2 + $0xc8] sm:$0xff]
    %v87 = vld [vmem:[#allocation2 + $0xd0] sm:$0xff]
    %v88 = vld [vmem:[#allocation2 + $0xd8] sm:$0xff]
    %v89 = vld [vmem:[#allocation2 + $0xe0] sm:$0xff]
    %v90 = vld [vmem:[#allocation2 + $0xe8] sm:$0xff]
    %v91 = vld [vmem:[#allocation2 + $0xf0] sm:$0xff]
    %v92 = vld [vmem:[#allocation2 + $0xf8] sm:$0xff]
    %v93 = vld [vmem:[#allocation2 + $0x100] sm:$0xff]
    %v94 = vld [vmem:[#allocation2 + $0x108] sm:$0xff]
    %v95 = vld [vmem:[#allocation2 + $0x110] sm:$0xff]
    %v96 = vld [vmem:[#allocation2 + $0x118] sm:$0xff]
    %v97 = vld [vmem:[#allocation2 + $0x120] sm:$0xff]
    %v98 = vld [vmem:[#allocation2 + $0x128] sm:$0xff]
    %v99 = vld [vmem:[#allocation2 + $0x130] sm:$0xff]
    %v100 = vld [vmem:[#allocation2 + $0x138] sm:$0xff]
    %v101 = vld [vmem:[#allocation2 + $0x140] sm:$0xff]
    %v102 = vld [vmem:[#allocation2 + $0x148] sm:$0xff]
    %v103 = vld [vmem:[#allocation2 + $0x150] sm:$0xff]
    %v104 = vld [vmem:[#allocation2 + $0x158] sm:$0xff]
    %v105 = vld [vmem:[#allocation2 + $0x160] sm:$0xff]
    %v106 = vld [vmem:[#allocation2 + $0x168] sm:$0xff]
    %v107 = vld [vmem:[#allocation2 + $0x170] sm:$0xff]
    %v108 = vld [vmem:[#allocation2 + $0x178] sm:$0xff]
    %v109 = vld [vmem:[#allocation2 + $0x180] sm:$0xff]
    %v110 = vld [vmem:[#allocation2 + $0x188] sm:$0xff]
    %v111 = vld [vmem:[#allocation2 + $0x190] sm:$0xff]
    %v112 = vld [vmem:[#allocation2 + $0x198] sm:$0xff]
    %v113 = vld [vmem:[#allocation2 + $0x1a0] sm:$0xff]
    %v114 = vld [vmem:[#allocation2 + $0x1a8] sm:$0xff]
    %v115 = vld [vmem:[#allocation2 + $0x1b0] sm:$0xff]
    %v116 = vld [vmem:[#allocation2 + $0x1b8] sm:$0xff]
    %v117 = vld [vmem:[#allocation2 + $0x1c0] sm:$0xff]
    %v118 = vld [vmem:[#allocation2 + $0x1c8] sm:$0xff]
    %v119 = vld [vmem:[#allocation2 + $0x1d0] sm:$0xff]
    %v120 = vld [vmem:[#allocation2 + $0x1d8] sm:$0xff]
    %v121 = vld [vmem:[#allocation2 + $0x1e0] sm:$0xff]
    %v122 = vld [vmem:[#allocation2 + $0x1e8] sm:$0xff]
    %v123 = vld [vmem:[#allocation2 + $0x1f0] sm:$0xff]
    %v124 = vld [vmem:[#allocation2 + $0x1f8] sm:$0xff]
    %v125 = vld [vmem:[#allocation4] sm:$0xff]
    %v126 = vld [vmem:[#allocation4 + $0x8] sm:$0xff]
    %v127 = vld [vmem:[#allocation4 + $0x10] sm:$0xff]
    %v128 = vld [vmem:[#allocation4 + $0x18] sm:$0xff]
    %v129 = vld [vmem:[#allocation4 + $0x20] sm:$0xff]
    %v130 = vld [vmem:[#allocation4 + $0x28] sm:$0xff]
    %v131 = vld [vmem:[#allocation4 + $0x30] sm:$0xff]
    %v132 = vld [vmem:[#allocation4 + $0x38] sm:$0xff]
    %v133 = vld [vmem:[#allocation4 + $0x40] sm:$0xff]
    %v134 = vld [vmem:[#allocation4 + $0x48] sm:$0xff]
    %v135 = vld [vmem:[#allocation4 + $0x50] sm:$0xff]
    %v136 = vld [vmem:[#allocation4 + $0x58] sm:$0xff]
    %v137 = vld [vmem:[#allocation4 + $0x60] sm:$0xff]
    %v138 = vld [vmem:[#allocation4 + $0x68] sm:$0xff]
    %v139 = vld [vmem:[#allocation4 + $0x70] sm:$0xff]
    %v140 = vld [vmem:[#allocation4 + $0x78] sm:$0xff]
    %v141 = vld [vmem:[#allocation4 + $0x80] sm:$0xff]
    %v142 = vld [vmem:[#allocation4 + $0x88] sm:$0xff]
    %v143 = vld [vmem:[#allocation4 + $0x90] sm:$0xff]
    %v144 = vld [vmem:[#allocation4 + $0x98] sm:$0xff]
    %v145 = vld [vmem:[#allocation4 + $0xa0] sm:$0xff]
    %v146 = vld [vmem:[#allocation4 + $0xa8] sm:$0xff]
    %v147 = vld [vmem:[#allocation4 + $0xb0] sm:$0xff]
    %v148 = vld [vmem:[#allocation4 + $0xb8] sm:$0xff]
    %v149 = vld [vmem:[#allocation4 + $0xc0] sm:$0xff]
    %v150 = vld [vmem:[#allocation4 + $0xc8] sm:$0xff]
    %v151 = vld [vmem:[#allocation4 + $0xd0] sm:$0xff]
    %v152 = vld [vmem:[#allocation4 + $0xd8] sm:$0xff]
    %v153 = vld [vmem:[#allocation4 + $0xe0] sm:$0xff]
    %v154 = vld [vmem:[#allocation4 + $0xe8] sm:$0xff]
    %v155 = vld [vmem:[#allocation4 + $0xf0] sm:$0xff]
    %v156 = vld [vmem:[#allocation4 + $0xf8] sm:$0xff]
    %v157 = vld [vmem:[%s2] sm:$0x1]
    %v159 = vlaneseq
    %v160 = vshrl.u32 %v159, 7
    %v161 = vsub.s32 0, %v160
    %v162 = vrot.slane %v157, %v161
    %164 = vmatprep.subr.mxu0 0.0
    %165 = vmatpush1.msra.mxu0 %v140
    %166 = vmatprep.subr.mxu0 0.0
    %167 = vmatpush1.msra.mxu0 %v139
    %168 = vmatprep.subr.mxu0 0.0
    %169 = vmatpush1.msra.mxu0 %v138
    %170 = vmatprep.subr.mxu0 0.0
    %171 = vmatpush1.msra.mxu0 %v137
    %172 = vmatprep.subr.mxu0 0.0
    %173 = vmatpush1.msra.mxu0 %v136
    %174 = vmatprep.subr.mxu0 0.0
    %175 = vmatpush1.msra.mxu0 %v135
    %176 = vmatprep.subr.mxu0 0.0
    %177 = vmatpush1.msra.mxu0 %v134
    %178 = vmatprep.subr.mxu0 0.0
    %179 = vmatpush1.msra.mxu0 %v133
    %180 = vmatprep.subr.mxu0 0.0
    %181 = vmatpush1.msra.mxu0 %v132
    %182 = vmatprep.subr.mxu0 0.0
    %183 = vmatpush1.msra.mxu0 %v131
    %184 = vmatprep.subr.mxu0 0.0
    %185 = vmatpush1.msra.mxu0 %v130
    %186 = vmatprep.subr.mxu0 0.0
    %187 = vmatpush1.msra.mxu0 %v129
    %188 = vmatprep.subr.mxu0 0.0
    %189 = vmatpush1.msra.mxu0 %v128
    %190 = vmatprep.subr.mxu0 0.0
    %191 = vmatpush1.msra.mxu0 %v127
    %192 = vmatprep.subr.mxu0 0.0
    %193 = vmatpush1.msra.mxu0 %v126
    %194 = vmatprep.subr.mxu0 0.0
    %195 = vmatpush1.msra.mxu0 %v125
    %196 = vmatprep.subr.mxu0 0.0
    %197 = vmatpush2.msra.mxu0 %v156
    %198 = vmatprep.subr.mxu0 0.0
    %199 = vmatpush2.msra.mxu0 %v155
    %200 = vmatprep.subr.mxu0 0.0
    %201 = vmatpush2.msra.mxu0 %v154
    %202 = vmatprep.subr.mxu0 0.0
    %203 = vmatpush2.msra.mxu0 %v153
    %204 = vmatprep.subr.mxu0 0.0
    %205 = vmatpush2.msra.mxu0 %v152
    %206 = vmatprep.subr.mxu0 0.0
    %207 = vmatpush2.msra.mxu0 %v151
    %208 = vmatprep.subr.mxu0 0.0
    %209 = vmatpush2.msra.mxu0 %v150
    %210 = vmatprep.subr.mxu0 0.0
    %211 = vmatpush2.msra.mxu0 %v149
    %212 = vmatprep.subr.mxu0 0.0
    %213 = vmatpush2.msra.mxu0 %v148
    %214 = vmatprep.subr.mxu0 0.0
    %215 = vmatpush2.msra.mxu0 %v147
    %216 = vmatprep.subr.mxu0 0.0
    %217 = vmatpush2.msra.mxu0 %v146
    %218 = vmatprep.subr.mxu0 0.0
    %219 = vmatpush2.msra.mxu0 %v145
    %220 = vmatprep.subr.mxu0 0.0
    %221 = vmatpush2.msra.mxu0 %v144
    %222 = vmatprep.subr.mxu0 0.0
    %223 = vmatpush2.msra.mxu0 %v143
    %224 = vmatprep.subr.mxu0 0.0
    %225 = vmatpush2.msra.mxu0 %v142
    %226 = vmatprep.subr.mxu0 0.0
    %227 = vmatpush2.msra.mxu0 %v141
    %228 = vmatprep.mubr.f32.mxu0 %v62
    %229 = vmatmul.mubr.f32.gmra.mxu0 %v61
    %v230 = vpop.f32.mrf.mxu0
    %v231 = vadd.f32 %v162, %v230
    %v232 = vpop.f32.mrf.mxu0
    %233 = vmatprep.mubr.f32.mxu0 %v64
    %234 = vmatmul.mubr.f32.gmra.mxu0 %v63
    %v235 = vpop.f32.mrf.mxu0
    %v236 = vadd.f32 %v162, %v235
    %v237 = vpop.f32.mrf.mxu0
    %238 = vmatprep.mubr.f32.mxu0 %v66
    %239 = vmatmul.mubr.f32.gmra.mxu0 %v65
    %v240 = vpop.f32.mrf.mxu0
    %v241 = vadd.f32 %v162, %v240
    %v242 = vpop.f32.mrf.mxu0
    %243 = vmatprep.mubr.f32.mxu0 %v68
    %244 = vmatmul.mubr.f32.gmra.mxu0 %v67
    %v245 = vpop.f32.mrf.mxu0
    %v246 = vadd.f32 %v162, %v245
    %v247 = vpop.f32.mrf.mxu0
    %248 = vmatprep.mubr.f32.mxu0 %v70
    %249 = vmatmul.mubr.f32.gmra.mxu0 %v69
    %v250 = vpop.f32.mrf.mxu0
    %v251 = vadd.f32 %v162, %v250
    %v252 = vpop.f32.mrf.mxu0
    %253 = vmatprep.mubr.f32.mxu0 %v72
    %254 = vmatmul.mubr.f32.gmra.mxu0 %v71
    %v255 = vpop.f32.mrf.mxu0
    %v256 = vadd.f32 %v162, %v255
    %v257 = vpop.f32.mrf.mxu0
    %258 = vmatprep.mubr.f32.mxu0 %v74
    %259 = vmatmul.mubr.f32.gmra.mxu0 %v73
    %v260 = vpop.f32.mrf.mxu0
    %v261 = vadd.f32 %v162, %v260
    %v262 = vpop.f32.mrf.mxu0
    %263 = vmatprep.mubr.f32.mxu0 %v76
    %264 = vmatmul.mubr.f32.gmra.mxu0 %v75
    %v265 = vpop.f32.mrf.mxu0
    %v266 = vadd.f32 %v162, %v265
    %v267 = vpop.f32.mrf.mxu0
    %268 = vmatprep.mubr.f32.mxu0 %v78
    %269 = vmatmul.mubr.f32.gmra.mxu0 %v77
    %v270 = vpop.f32.mrf.mxu0
    %v271 = vadd.f32 %v162, %v270
    %v272 = vpop.f32.mrf.mxu0
    %273 = vmatprep.mubr.f32.mxu0 %v80
    %274 = vmatmul.mubr.f32.gmra.mxu0 %v79
    %v275 = vpop.f32.mrf.mxu0
    %v276 = vadd.f32 %v162, %v275
    %v277 = vpop.f32.mrf.mxu0
    %278 = vmatprep.mubr.f32.mxu0 %v82
    %279 = vmatmul.mubr.f32.gmra.mxu0 %v81
    %v280 = vpop.f32.mrf.mxu0
    %v281 = vadd.f32 %v162, %v280
    %v282 = vpop.f32.mrf.mxu0
    %283 = vmatprep.mubr.f32.mxu0 %v84
    %284 = vmatmul.mubr.f32.gmra.mxu0 %v83
    %v285 = vpop.f32.mrf.mxu0
    %v286 = vadd.f32 %v162, %v285
    %v287 = vpop.f32.mrf.mxu0
    %288 = vmatprep.mubr.f32.mxu0 %v86
    %289 = vmatmul.mubr.f32.gmra.mxu0 %v85
    %v290 = vpop.f32.mrf.mxu0
    %v291 = vadd.f32 %v162, %v290
    %v292 = vpop.f32.mrf.mxu0
    %293 = vmatprep.mubr.f32.mxu0 %v88
    %294 = vmatmul.mubr.f32.gmra.mxu0 %v87
    %v295 = vpop.f32.mrf.mxu0
    %v296 = vadd.f32 %v162, %v295
    %v297 = vpop.f32.mrf.mxu0
    %298 = vmatprep.mubr.f32.mxu0 %v90
    %299 = vmatmul.mubr.f32.gmra.mxu0 %v89
    %v300 = vpop.f32.mrf.mxu0
    %v301 = vadd.f32 %v162, %v300
    %v302 = vpop.f32.mrf.mxu0
    %303 = vmatprep.mubr.f32.mxu0 %v92
    %304 = vmatmul.mubr.f32.gmra.mxu0 %v91
    %v305 = vpop.f32.mrf.mxu0
    %v306 = vadd.f32 %v162, %v305
    %v307 = vpop.f32.mrf.mxu0
    %308 = vmatprep.mubr.f32.mxu0 %v94
    %309 = vmatmul.mubr.f32.gmra.mxu0 %v93
    %v310 = vpop.f32.mrf.mxu0
    %v311 = vadd.f32 %v162, %v310
    %v312 = vpop.f32.mrf.mxu0
    %313 = vmatprep.mubr.f32.mxu0 %v96
    %314 = vmatmul.mubr.f32.gmra.mxu0 %v95
    %v315 = vpop.f32.mrf.mxu0
    %v316 = vadd.f32 %v162, %v315
    %v317 = vpop.f32.mrf.mxu0
    %318 = vmatprep.mubr.f32.mxu0 %v98
    %319 = vmatmul.mubr.f32.gmra.mxu0 %v97
    %v320 = vpop.f32.mrf.mxu0
    %v321 = vadd.f32 %v162, %v320
    %v322 = vpop.f32.mrf.mxu0
    %323 = vmatprep.mubr.f32.mxu0 %v100
    %324 = vmatmul.mubr.f32.gmra.mxu0 %v99
    %v325 = vpop.f32.mrf.mxu0
    %v326 = vadd.f32 %v162, %v325
    %v327 = vpop.f32.mrf.mxu0
    %328 = vmatprep.mubr.f32.mxu0 %v102
    %329 = vmatmul.mubr.f32.gmra.mxu0 %v101
    %v330 = vpop.f32.mrf.mxu0
    %v331 = vadd.f32 %v162, %v330
    %v332 = vpop.f32.mrf.mxu0
    %333 = vmatprep.mubr.f32.mxu0 %v104
    %334 = vmatmul.mubr.f32.gmra.mxu0 %v103
    %v335 = vpop.f32.mrf.mxu0
    %v336 = vadd.f32 %v162, %v335
    %v337 = vpop.f32.mrf.mxu0
    %338 = vmatprep.mubr.f32.mxu0 %v106
    %339 = vmatmul.mubr.f32.gmra.mxu0 %v105
    %v340 = vpop.f32.mrf.mxu0
    %v341 = vadd.f32 %v162, %v340
    %v342 = vpop.f32.mrf.mxu0
    %343 = vmatprep.mubr.f32.mxu0 %v108
    %344 = vmatmul.mubr.f32.gmra.mxu0 %v107
    %v345 = vpop.f32.mrf.mxu0
    %v346 = vadd.f32 %v162, %v345
    %v347 = vpop.f32.mrf.mxu0
    %348 = vmatprep.mubr.f32.mxu0 %v110
    %349 = vmatmul.mubr.f32.gmra.mxu0 %v109
    %v350 = vpop.f32.mrf.mxu0
    %v351 = vadd.f32 %v162, %v350
    %v352 = vpop.f32.mrf.mxu0
    %353 = vmatprep.mubr.f32.mxu0 %v112
    %354 = vmatmul.mubr.f32.gmra.mxu0 %v111
    %v355 = vpop.f32.mrf.mxu0
    %v356 = vadd.f32 %v162, %v355
    %v357 = vpop.f32.mrf.mxu0
    %358 = vmatprep.mubr.f32.mxu0 %v114
    %359 = vmatmul.mubr.f32.gmra.mxu0 %v113
    %v360 = vpop.f32.mrf.mxu0
    %v361 = vadd.f32 %v162, %v360
    %v362 = vpop.f32.mrf.mxu0
    %363 = vmatprep.mubr.f32.mxu0 %v116
    %364 = vmatmul.mubr.f32.gmra.mxu0 %v115
    %v365 = vpop.f32.mrf.mxu0
    %v366 = vadd.f32 %v162, %v365
    %v367 = vpop.f32.mrf.mxu0
    %368 = vmatprep.mubr.f32.mxu0 %v118
    %369 = vmatmul.mubr.f32.gmra.mxu0 %v117
    %v370 = vpop.f32.mrf.mxu0
    %v371 = vadd.f32 %v162, %v370
    %v372 = vpop.f32.mrf.mxu0
    %373 = vmatprep.mubr.f32.mxu0 %v120
    %374 = vmatmul.mubr.f32.gmra.mxu0 %v119
    %v375 = vpop.f32.mrf.mxu0
    %v376 = vadd.f32 %v162, %v375
    %v377 = vpop.f32.mrf.mxu0
    %378 = vmatprep.mubr.f32.mxu0 %v122
    %379 = vmatmul.mubr.f32.gmra.mxu0 %v121
    %v380 = vpop.f32.mrf.mxu0
    %v381 = vadd.f32 %v162, %v380
    %v382 = vpop.f32.mrf.mxu0
    %383 = vmatprep.mubr.f32.mxu0 %v124
    %384 = vmatmul.mubr.f32.gmra.mxu0 %v123
    %v385 = vpop.f32.mrf.mxu0
    %v386 = vadd.f32 %v162, %v385
    %v387 = vpop.f32.mrf.mxu0
    %388 = vdwg.mxu0
    %v389 = vmax.f32 %v231, 0.0
    %v390 = vmax.f32 %v236, 0.0
    %v391 = vmax.f32 %v241, 0.0
    %v392 = vmax.f32 %v246, 0.0
    %v393 = vmax.f32 %v251, 0.0
    %v394 = vmax.f32 %v256, 0.0
    %v395 = vmax.f32 %v261, 0.0
    %v396 = vmax.f32 %v266, 0.0
    %v397 = vmax.f32 %v271, 0.0
    %v398 = vmax.f32 %v276, 0.0
    %v399 = vmax.f32 %v281, 0.0
    %v400 = vmax.f32 %v286, 0.0
    %v401 = vmax.f32 %v291, 0.0
    %v402 = vmax.f32 %v296, 0.0
    %v403 = vmax.f32 %v301, 0.0
    %v404 = vmax.f32 %v306, 0.0
    %v405 = vmax.f32 %v311, 0.0
    %v406 = vmax.f32 %v316, 0.0
    %v407 = vmax.f32 %v321, 0.0
    %v408 = vmax.f32 %v326, 0.0
    %v409 = vmax.f32 %v331, 0.0
    %v410 = vmax.f32 %v336, 0.0
    %v411 = vmax.f32 %v341, 0.0
    %v412 = vmax.f32 %v346, 0.0
    %v413 = vmax.f32 %v351, 0.0
    %v414 = vmax.f32 %v356, 0.0
    %v415 = vmax.f32 %v361, 0.0
    %v416 = vmax.f32 %v366, 0.0
    %v417 = vmax.f32 %v371, 0.0
    %v418 = vmax.f32 %v376, 0.0
    %v419 = vmax.f32 %v381, 0.0
    %v420 = vmax.f32 %v386, 0.0
    %v421 = vld [vmem:[#allocation6] sm:$0xff]
    %v422 = vld [vmem:[#allocation6 + $0x8] sm:$0xff]
    %v423 = vld [vmem:[#allocation6 + $0x10] sm:$0xff]
    %v424 = vld [vmem:[#allocation6 + $0x18] sm:$0xff]
    %v425 = vld [vmem:[#allocation6 + $0x20] sm:$0xff]
    %v426 = vld [vmem:[#allocation6 + $0x28] sm:$0xff]
    %v427 = vld [vmem:[#allocation6 + $0x30] sm:$0xff]
    %v428 = vld [vmem:[#allocation6 + $0x38] sm:$0xff]
    %v429 = vld [vmem:[#allocation6 + $0x40] sm:$0xff]
    %v430 = vld [vmem:[#allocation6 + $0x48] sm:$0xff]
    %v431 = vld [vmem:[#allocation6 + $0x50] sm:$0xff]
    %v432 = vld [vmem:[#allocation6 + $0x58] sm:$0xff]
    %v433 = vld [vmem:[#allocation6 + $0x60] sm:$0xff]
    %v434 = vld [vmem:[#allocation6 + $0x68] sm:$0xff]
    %v435 = vld [vmem:[#allocation6 + $0x70] sm:$0xff]
    %v436 = vld [vmem:[#allocation6 + $0x78] sm:$0xff]
    %v437 = vld [vmem:[%s4] sm:$0x1]
    %v439 = vlaneseq
    %v440 = vshrl.u32 %v439, 7
    %v441 = vsub.s32 0, %v440
    %v442 = vrot.slane %v437, %v441
    %444 = vmatprep.subr.mxu0 0.0
    %445 = vmatpush1.msra.mxu0 %v436
    %446 = vmatprep.subr.mxu0 0.0
    %447 = vmatpush1.msra.mxu0 %v435
    %448 = vmatprep.subr.mxu0 0.0
    %449 = vmatpush1.msra.mxu0 %v434
    %450 = vmatprep.subr.mxu0 0.0
    %451 = vmatpush1.msra.mxu0 %v433
    %452 = vmatprep.subr.mxu0 0.0
    %453 = vmatpush1.msra.mxu0 %v432
    %454 = vmatprep.subr.mxu0 0.0
    %455 = vmatpush1.msra.mxu0 %v431
    %456 = vmatprep.subr.mxu0 0.0
    %457 = vmatpush1.msra.mxu0 %v430
    %458 = vmatprep.subr.mxu0 0.0
    %459 = vmatpush1.msra.mxu0 %v429
    %460 = vmatprep.subr.mxu0 0.0
    %461 = vmatpush1.msra.mxu0 %v428
    %462 = vmatprep.subr.mxu0 0.0
    %463 = vmatpush1.msra.mxu0 %v427
    %464 = vmatprep.subr.mxu0 0.0
    %465 = vmatpush1.msra.mxu0 %v426
    %466 = vmatprep.subr.mxu0 0.0
    %467 = vmatpush1.msra.mxu0 %v425
    %468 = vmatprep.subr.mxu0 0.0
    %469 = vmatpush1.msra.mxu0 %v424
    %470 = vmatprep.subr.mxu0 0.0
    %471 = vmatpush1.msra.mxu0 %v423
    %472 = vmatprep.subr.mxu0 0.0
    %473 = vmatpush1.msra.mxu0 %v422
    %474 = vmatprep.subr.mxu0 0.0
    %475 = vmatpush1.msra.mxu0 %v421
    %476 = vmatprep.subr.mxu0 0.0
    %477 = vmatpush2.msra.mxu0 0.0
    %478 = vmatprep.subr.mxu0 0.0
    %479 = vmatpush2.msra.mxu0 0.0
    %480 = vmatprep.subr.mxu0 0.0
    %481 = vmatpush2.msra.mxu0 0.0
    %482 = vmatprep.subr.mxu0 0.0
    %483 = vmatpush2.msra.mxu0 0.0
    %484 = vmatprep.subr.mxu0 0.0
    %485 = vmatpush2.msra.mxu0 0.0
    %486 = vmatprep.subr.mxu0 0.0
    %487 = vmatpush2.msra.mxu0 0.0
    %488 = vmatprep.subr.mxu0 0.0
    %489 = vmatpush2.msra.mxu0 0.0
    %490 = vmatprep.subr.mxu0 0.0
    %491 = vmatpush2.msra.mxu0 0.0
    %492 = vmatprep.subr.mxu0 0.0
    %493 = vmatpush2.msra.mxu0 0.0
    %494 = vmatprep.subr.mxu0 0.0
    %495 = vmatpush2.msra.mxu0 0.0
    %496 = vmatprep.subr.mxu0 0.0
    %497 = vmatpush2.msra.mxu0 0.0
    %498 = vmatprep.subr.mxu0 0.0
    %499 = vmatpush2.msra.mxu0 0.0
    %500 = vmatprep.subr.mxu0 0.0
    %501 = vmatpush2.msra.mxu0 0.0
    %502 = vmatprep.subr.mxu0 0.0
    %503 = vmatpush2.msra.mxu0 0.0
    %504 = vmatprep.subr.mxu0 0.0
    %505 = vmatpush2.msra.mxu0 0.0
    %506 = vmatprep.subr.mxu0 0.0
    %507 = vmatpush2.msra.mxu0 0.0
    %508 = vmatprep.mubr.f32.mxu0 0.0
    %509 = vmatmul.mubr.f32.gmra.mxu0 %v389
    %v510 = vpop.f32.mrf.mxu0
    %v511 = vadd.f32 %v442, %v510
    %v512 = vpop.f32.mrf.mxu0
    %513 = vmatprep.mubr.f32.mxu0 0.0
    %514 = vmatmul.mubr.f32.gmra.mxu0 %v390
    %v515 = vpop.f32.mrf.mxu0
    %v516 = vadd.f32 %v442, %v515
    %v517 = vpop.f32.mrf.mxu0
    %518 = vmatprep.mubr.f32.mxu0 0.0
    %519 = vmatmul.mubr.f32.gmra.mxu0 %v391
    %v520 = vpop.f32.mrf.mxu0
    %v521 = vadd.f32 %v442, %v520
    %v522 = vpop.f32.mrf.mxu0
    %523 = vmatprep.mubr.f32.mxu0 0.0
    %524 = vmatmul.mubr.f32.gmra.mxu0 %v392
    %v525 = vpop.f32.mrf.mxu0
    %v526 = vadd.f32 %v442, %v525
    %v527 = vpop.f32.mrf.mxu0
    %528 = vmatprep.mubr.f32.mxu0 0.0
    %529 = vmatmul.mubr.f32.gmra.mxu0 %v393
    %v530 = vpop.f32.mrf.mxu0
    %v531 = vadd.f32 %v442, %v530
    %v532 = vpop.f32.mrf.mxu0
    %533 = vmatprep.mubr.f32.mxu0 0.0
    %534 = vmatmul.mubr.f32.gmra.mxu0 %v394
    %v535 = vpop.f32.mrf.mxu0
    %v536 = vadd.f32 %v442, %v535
    %v537 = vpop.f32.mrf.mxu0
    %538 = vmatprep.mubr.f32.mxu0 0.0
    %539 = vmatmul.mubr.f32.gmra.mxu0 %v395
    %v540 = vpop.f32.mrf.mxu0
    %v541 = vadd.f32 %v442, %v540
    %v542 = vpop.f32.mrf.mxu0
    %543 = vmatprep.mubr.f32.mxu0 0.0
    %544 = vmatmul.mubr.f32.gmra.mxu0 %v396
    %v545 = vpop.f32.mrf.mxu0
    %v546 = vadd.f32 %v442, %v545
    %v547 = vpop.f32.mrf.mxu0
    %548 = vmatprep.mubr.f32.mxu0 0.0
    %549 = vmatmul.mubr.f32.gmra.mxu0 %v397
    %v550 = vpop.f32.mrf.mxu0
    %v551 = vadd.f32 %v442, %v550
    %v552 = vpop.f32.mrf.mxu0
    %553 = vmatprep.mubr.f32.mxu0 0.0
    %554 = vmatmul.mubr.f32.gmra.mxu0 %v398
    %v555 = vpop.f32.mrf.mxu0
    %v556 = vadd.f32 %v442, %v555
    %v557 = vpop.f32.mrf.mxu0
    %558 = vmatprep.mubr.f32.mxu0 0.0
    %559 = vmatmul.mubr.f32.gmra.mxu0 %v399
    %v560 = vpop.f32.mrf.mxu0
    %v561 = vadd.f32 %v442, %v560
    %v562 = vpop.f32.mrf.mxu0
    %563 = vmatprep.mubr.f32.mxu0 0.0
    %564 = vmatmul.mubr.f32.gmra.mxu0 %v400
    %v565 = vpop.f32.mrf.mxu0
    %v566 = vadd.f32 %v442, %v565
    %v567 = vpop.f32.mrf.mxu0
    %568 = vmatprep.mubr.f32.mxu0 0.0
    %569 = vmatmul.mubr.f32.gmra.mxu0 %v401
    %v570 = vpop.f32.mrf.mxu0
    %v571 = vadd.f32 %v442, %v570
    %v572 = vpop.f32.mrf.mxu0
    %573 = vmatprep.mubr.f32.mxu0 0.0
    %574 = vmatmul.mubr.f32.gmra.mxu0 %v402
    %v575 = vpop.f32.mrf.mxu0
    %v576 = vadd.f32 %v442, %v575
    %v577 = vpop.f32.mrf.mxu0
    %578 = vmatprep.mubr.f32.mxu0 0.0
    %579 = vmatmul.mubr.f32.gmra.mxu0 %v403
    %v580 = vpop.f32.mrf.mxu0
    %v581 = vadd.f32 %v442, %v580
    %v582 = vpop.f32.mrf.mxu0
    %583 = vmatprep.mubr.f32.mxu0 0.0
    %584 = vmatmul.mubr.f32.gmra.mxu0 %v404
    %v585 = vpop.f32.mrf.mxu0
    %v586 = vadd.f32 %v442, %v585
    %v587 = vpop.f32.mrf.mxu0
    %588 = vmatprep.mubr.f32.mxu0 0.0
    %589 = vmatmul.mubr.f32.gmra.mxu0 %v405
    %v590 = vpop.f32.mrf.mxu0
    %v591 = vadd.f32 %v442, %v590
    %v592 = vpop.f32.mrf.mxu0
    %593 = vmatprep.mubr.f32.mxu0 0.0
    %594 = vmatmul.mubr.f32.gmra.mxu0 %v406
    %v595 = vpop.f32.mrf.mxu0
    %v596 = vadd.f32 %v442, %v595
    %v597 = vpop.f32.mrf.mxu0
    %598 = vmatprep.mubr.f32.mxu0 0.0
    %599 = vmatmul.mubr.f32.gmra.mxu0 %v407
    %v600 = vpop.f32.mrf.mxu0
    %v601 = vadd.f32 %v442, %v600
    %v602 = vpop.f32.mrf.mxu0
    %603 = vmatprep.mubr.f32.mxu0 0.0
    %604 = vmatmul.mubr.f32.gmra.mxu0 %v408
    %v605 = vpop.f32.mrf.mxu0
    %v606 = vadd.f32 %v442, %v605
    %v607 = vpop.f32.mrf.mxu0
    %608 = vmatprep.mubr.f32.mxu0 0.0
    %609 = vmatmul.mubr.f32.gmra.mxu0 %v409
    %v610 = vpop.f32.mrf.mxu0
    %v611 = vadd.f32 %v442, %v610
    %v612 = vpop.f32.mrf.mxu0
    %613 = vmatprep.mubr.f32.mxu0 0.0
    %614 = vmatmul.mubr.f32.gmra.mxu0 %v410
    %v615 = vpop.f32.mrf.mxu0
    %v616 = vadd.f32 %v442, %v615
    %v617 = vpop.f32.mrf.mxu0
    %618 = vmatprep.mubr.f32.mxu0 0.0
    %619 = vmatmul.mubr.f32.gmra.mxu0 %v411
    %v620 = vpop.f32.mrf.mxu0
    %v621 = vadd.f32 %v442, %v620
    %v622 = vpop.f32.mrf.mxu0
    %623 = vmatprep.mubr.f32.mxu0 0.0
    %624 = vmatmul.mubr.f32.gmra.mxu0 %v412
    %v625 = vpop.f32.mrf.mxu0
    %v626 = vadd.f32 %v442, %v625
    %v627 = vpop.f32.mrf.mxu0
    %628 = vmatprep.mubr.f32.mxu0 0.0
    %629 = vmatmul.mubr.f32.gmra.mxu0 %v413
    %v630 = vpop.f32.mrf.mxu0
    %v631 = vadd.f32 %v442, %v630
    %v632 = vpop.f32.mrf.mxu0
    %633 = vmatprep.mubr.f32.mxu0 0.0
    %634 = vmatmul.mubr.f32.gmra.mxu0 %v414
    %v635 = vpop.f32.mrf.mxu0
    %v636 = vadd.f32 %v442, %v635
    %v637 = vpop.f32.mrf.mxu0
    %638 = vmatprep.mubr.f32.mxu0 0.0
    %639 = vmatmul.mubr.f32.gmra.mxu0 %v415
    %v640 = vpop.f32.mrf.mxu0
    %v641 = vadd.f32 %v442, %v640
    %v642 = vpop.f32.mrf.mxu0
    %643 = vmatprep.mubr.f32.mxu0 0.0
    %644 = vmatmul.mubr.f32.gmra.mxu0 %v416
    %v645 = vpop.f32.mrf.mxu0
    %v646 = vadd.f32 %v442, %v645
    %v647 = vpop.f32.mrf.mxu0
    %648 = vmatprep.mubr.f32.mxu0 0.0
    %649 = vmatmul.mubr.f32.gmra.mxu0 %v417
    %v650 = vpop.f32.mrf.mxu0
    %v651 = vadd.f32 %v442, %v650
    %v652 = vpop.f32.mrf.mxu0
    %653 = vmatprep.mubr.f32.mxu0 0.0
    %654 = vmatmul.mubr.f32.gmra.mxu0 %v418
    %v655 = vpop.f32.mrf.mxu0
    %v656 = vadd.f32 %v442, %v655
    %v657 = vpop.f32.mrf.mxu0
    %658 = vmatprep.mubr.f32.mxu0 0.0
    %659 = vmatmul.mubr.f32.gmra.mxu0 %v419
    %v660 = vpop.f32.mrf.mxu0
    %v661 = vadd.f32 %v442, %v660
    %v662 = vpop.f32.mrf.mxu0
    %663 = vmatprep.mubr.f32.mxu0 0.0
    %664 = vmatmul.mubr.f32.gmra.mxu0 %v420
    %v665 = vpop.f32.mrf.mxu0
    %v666 = vadd.f32 %v442, %v665
    %v667 = vpop.f32.mrf.mxu0
    %668 = vdwg.mxu0
    %669 = vst [vmem:[%s5] sm:$0xff] %v511
    %670 = vst [vmem:[%s5 + $0x8] sm:$0xff] %v516
    %671 = vst [vmem:[%s5 + $0x10] sm:$0xff] %v521
    %672 = vst [vmem:[%s5 + $0x18] sm:$0xff] %v526
    %673 = vst [vmem:[%s5 + $0x20] sm:$0xff] %v531
    %674 = vst [vmem:[%s5 + $0x28] sm:$0xff] %v536
    %675 = vst [vmem:[%s5 + $0x30] sm:$0xff] %v541
    %676 = vst [vmem:[%s5 + $0x38] sm:$0xff] %v546
    %677 = vst [vmem:[%s5 + $0x40] sm:$0xff] %v551
    %678 = vst [vmem:[%s5 + $0x48] sm:$0xff] %v556
    %679 = vst [vmem:[%s5 + $0x50] sm:$0xff] %v561
    %680 = vst [vmem:[%s5 + $0x58] sm:$0xff] %v566
    %681 = vst [vmem:[%s5 + $0x60] sm:$0xff] %v571
    %682 = vst [vmem:[%s5 + $0x68] sm:$0xff] %v576
    %683 = vst [vmem:[%s5 + $0x70] sm:$0xff] %v581
    %684 = vst [vmem:[%s5 + $0x78] sm:$0xff] %v586
    %685 = vst [vmem:[%s5 + $0x80] sm:$0xff] %v591
    %686 = vst [vmem:[%s5 + $0x88] sm:$0xff] %v596
    %687 = vst [vmem:[%s5 + $0x90] sm:$0xff] %v601
    %688 = vst [vmem:[%s5 + $0x98] sm:$0xff] %v606
    %689 = vst [vmem:[%s5 + $0xa0] sm:$0xff] %v611
    %690 = vst [vmem:[%s5 + $0xa8] sm:$0xff] %v616
    %691 = vst [vmem:[%s5 + $0xb0] sm:$0xff] %v621
    %692 = vst [vmem:[%s5 + $0xb8] sm:$0xff] %v626
    %693 = vst [vmem:[%s5 + $0xc0] sm:$0xff] %v631
    %694 = vst [vmem:[%s5 + $0xc8] sm:$0xff] %v636
    %695 = vst [vmem:[%s5 + $0xd0] sm:$0xff] %v641
    %696 = vst [vmem:[%s5 + $0xd8] sm:$0xff] %v646
    %697 = vst [vmem:[%s5 + $0xe0] sm:$0xff] %v651
    %698 = vst [vmem:[%s5 + $0xe8] sm:$0xff] %v656
    %699 = vst [vmem:[%s5 + $0xf0] sm:$0xff] %v661
    %700 = vst [vmem:[%s5 + $0xf8] sm:$0xff] %v666
    // Predicated region
    $region34: #{forward.1} parent=1 // pred_check
      _
    $region35: #{forward.1} parent=1 // pred_check_branch
      %702 = sbr.rel (0) target = $region37
    $region36: #{forward.1} parent=1 // pred_region
      _
    $region37: #{forward.1} parent=1 // pred_fallthru
      _
    // Predicated region
    $region38: #{forward.1} parent=1 // pred_check
      _
    $region39: #{forward.1} parent=1 // pred_check_branch
      %704 = sbr.rel (0) target = $region41
    $region40: #{forward.1} parent=1 // pred_region
      _
    $region41: #{forward.1} parent=1 // pred_fallthru
      _
    %705 = vsyncpa [#allocation3], 1
    %706 = vsyncpa [#allocation5], 1

</llo_original>
